<compile_context>
chip_gen: v6e
topology: v6e:2x2x1
jax: 0.10.0
libtpu: 0.0.40
codegen_flags: <defaults>
</compile_context>

<pallas_src>
import functools

import jax
import jax.numpy as jnp
from jax.experimental import pallas as pl
from jax.experimental.pallas import tpu as pltpu

NODE_DISABLE = 2
NODE_INPUT = 4
NODE_WALL = 6

NUM_TYPES = 9     # num_types in EagleModel.__init__
STATE_SIZE = 4    # state_size in EagleModel.__init__
IN_DIM = 32       # main_model.in_dim
HIDDEN = 64       # synthetic main_model hidden width
OUT_DIM = 32      # main_model.out_dim


def _eagle_rollout_kernel(
    init_state_ref,   # (4, tile_n)      state[:, 0], feature-major
    ids_prev_ref,     # (1, 1, tile_n)   node type id at t-1
    ids_next_ref,     # (1, 1, tile_n)   node type id at t
    state_next_ref,   # (1, 4, tile_n)   state[:, t], feature-major
    wa_s_ref,         # (HIDDEN, 4)      (w_emb_state @ w1)^T
    wa_t_ref,         # (HIDDEN, 9)      (w_emb_type  @ w1)^T
    ba_ref,           # (HIDDEN, 1)      (b_emb @ w1 + b1)^T
    wb_ref,           # (4, HIDDEN)      (w2 @ w_pred)^T
    bb_ref,           # (4, 1)           (b2 @ w_pred + b_pred)^T
    out_ref,          # (1, 4, tile_n)   next_output
    nxt_ref,          # (1, 4, tile_n)   next_state (state_hat[:, t])
    tgt_ref,          # (1, 4, tile_n)   target
    carry_ref,        # VMEM (4, tile_n) f32 -- carried state_hat[-1]
):
    t = pl.program_id(1)

    @pl.when(t == 0)
    def _():
        carry_ref[...] = init_state_ref[...]

    ns = carry_ref[...]                               # (4, tile_n) f32
    tile_n = ns.shape[1]

    # Rebuild the one-hot type encoding in-kernel from int ids (cheap VPU
    # filler; saves 8 f32/node/step of HBM traffic).
    ids_prev = ids_prev_ref[0]                        # (1, tile_n) int32
    one_hot = (jax.lax.broadcasted_iota(jnp.int32, (NUM_TYPES, tile_n), 0)
               == ids_prev).astype(jnp.float32)       # (9, tile_n)

    # Fused (embedding -> main_model.layer1), relu, fused (layer2 -> pred_head)
    h = (jnp.dot(wa_s_ref[...], ns, preferred_element_type=jnp.float32)
         + jnp.dot(wa_t_ref[...], one_hot, preferred_element_type=jnp.float32)
         + ba_ref[...])                               # (HIDDEN, tile_n)
    h = jnp.maximum(h, 0.0)
    out = jnp.dot(wb_ref[...], h, preferred_element_type=jnp.float32) + bb_ref[...]

    state_next = state_next_ref[0]                    # (4, tile_n)
    nxt = ns + out                                    # next_state
    tgt = state_next - ns                             # target

    # Boundary mask from node_type[:, t]: INPUT | WALL | DISABLE -> copy truth.
    ids_next = ids_next_ref[0]                        # (1, tile_n)
    mask = jnp.logical_or(
        jnp.logical_or(ids_next == NODE_INPUT, ids_next == NODE_WALL),
        ids_next == NODE_DISABLE)
    nxt = jnp.where(mask, state_next, nxt)

    out_ref[0] = out
    nxt_ref[0] = nxt
    tgt_ref[0] = tgt
    carry_ref[...] = nxt                              # carry to next timestep


def _fuse_params(params):
    """Fold embedding∘W1 and W2∘pred_head; return feature-major (transposed) weights."""
    w_es, w_et, b_e, w1, b1, w2, b2, wp, bp = params
    wa_s = w_es @ w1                    # (4, HIDDEN)
    wa_t = w_et @ w1                    # (9, HIDDEN)
    ba = b_e @ w1 + b1                  # (1, HIDDEN)
    wb = w2 @ wp                        # (HIDDEN, 4)
    bb = b2 @ wp + bp                   # (1, 4)
    return (wa_s.T, wa_t.T, ba.T, wb.T, bb.T)


def _pick_tile_n(n, requested):
    t = min(requested, n)
    if n % t != 0 or (t != n and t % 128 != 0):
        t = n  # full-extent block along the node axis is always legal
    return t


@functools.partial(jax.jit, static_argnames=("tile_n",))
def eagle_forward(state, mesh_pos, edges, node_type, batch_idx, params, tile_n=512):
    """EagleModel.forward: returns (state_hat, output_hat, target).

    state: (N, T, 4)  mesh_pos: (N, T, 2)  edges: (E, T, 2)
    node_type: (N, T, 9) one-hot  batch_idx: (N,)
    mesh_pos / edges / batch_idx are plumbed through for API fidelity but the
    synthetic main_model does not consume them.
    """
    del mesh_pos, edges, batch_idx  # TODO(synk): consumed by the real GNN main_model
    N, T, _ = state.shape
    tile_n = _pick_tile_n(N, tile_n)

    fused = _fuse_params(tuple(p.astype(jnp.float32) for p in params))

    # Feature-major layout: node axis in lanes.
    state_fm = jnp.transpose(state.astype(jnp.float32), (1, 2, 0))      # (T, 4, N)
    # node_type is a one-hot encoding -> compact to int32 ids (1 word/node/step).
    ids_fm = jnp.transpose(jnp.argmax(node_type, axis=-1).astype(jnp.int32),
                           (1, 0))[:, None, :]                          # (T, 1, N)
    init_fm = state_fm[0]                                               # (4, N)

    grid = (N // tile_n, T - 1)   # node axis "parallel" (megacore), time "arbitrary"

    def node_time_spec(feat, time_off):
        return pl.BlockSpec((1, feat, tile_n),
                            lambda i, t, _o=time_off: (t + _o, 0, i))

    def weight_spec(w):
        return pl.BlockSpec(w.shape, lambda i, t: (0, 0))

    in_specs = [
        pl.BlockSpec((STATE_SIZE, tile_n), lambda i, t: (0, i)),  # init state
        node_time_spec(1, 0),            # ids at t-1
        node_time_spec(1, 1),            # ids at t
        node_time_spec(STATE_SIZE, 1),   # state[:, t]
    ] + [weight_spec(w) for w in fused]

    out_specs = [node_time_spec(STATE_SIZE, 0)] * 3
    out_shape = [jax.ShapeDtypeStruct((T - 1, STATE_SIZE, N), jnp.float32)] * 3

    out_fm, nxt_fm, tgt_fm = pl.pallas_call(
        _eagle_rollout_kernel,
        grid=grid,
        in_specs=in_specs,
        out_specs=out_specs,
        out_shape=out_shape,
        scratch_shapes=[pltpu.VMEM((STATE_SIZE, tile_n), jnp.float32)],
        compiler_params=pltpu.CompilerParams(
            dimension_semantics=("parallel", "arbitrary"),
            vmem_limit_bytes=32 * 1024 * 1024),
    )(init_fm, ids_fm, ids_fm, state_fm, *fused)

    # Back to node-major (N, T-1, 4) / (N, T, 4) for the module's return convention.
    output_hat = jnp.transpose(out_fm, (2, 0, 1))
    target = jnp.transpose(tgt_fm, (2, 0, 1))
    state_hat = jnp.concatenate(
        [state[:, :1].astype(jnp.float32), jnp.transpose(nxt_fm, (2, 0, 1))], axis=1)
    return state_hat, output_hat, target


def eagle_forward_ref(state, node_type, params):
    """Pure-JAX reference (unfused weights, original op order)."""
    w_es, w_et, b_e, w1, b1, w2, b2, wp, bp = params
    T = state.shape[1]
    state_hat = [state[:, 0].astype(jnp.float32)]
    output_hat, target = [], []
    for t in range(1, T):
        ns = state_hat[-1]
        h = ns @ w_es + node_type[:, t - 1] @ w_et + b_e
        h = jnp.maximum(h @ w1 + b1, 0.0)
        h = h @ w2 + b2
        out = h @ wp + bp
        nxt = ns + out
        tgt = state[:, t] - ns
        ntn = node_type[:, t]
        mask = ((ntn[:, NODE_INPUT] == 1) | (ntn[:, NODE_WALL] == 1)
                | (ntn[:, NODE_DISABLE] == 1))[:, None]
        nxt = jnp.where(mask, state[:, t], nxt)
        state_hat.append(nxt)
        output_hat.append(out)
        target.append(tgt)
    return (jnp.stack(state_hat, axis=1),
            jnp.stack(output_hat, axis=1),
            jnp.stack(target, axis=1))


def init_params(key):
    ks = jax.random.split(key, 9)
    s = 0.1
    return (
        s * jax.random.normal(ks[0], (STATE_SIZE, IN_DIM), jnp.float32),
        s * jax.random.normal(ks[1], (NUM_TYPES, IN_DIM), jnp.float32),
        s * jax.random.normal(ks[2], (1, IN_DIM), jnp.float32),
        s * jax.random.normal(ks[3], (IN_DIM, HIDDEN), jnp.float32),
        s * jax.random.normal(ks[4], (1, HIDDEN), jnp.float32),
        s * jax.random.normal(ks[5], (HIDDEN, OUT_DIM), jnp.float32),
        s * jax.random.normal(ks[6], (1, OUT_DIM), jnp.float32),
        s * jax.random.normal(ks[7], (OUT_DIM, STATE_SIZE), jnp.float32),
        s * jax.random.normal(ks[8], (1, STATE_SIZE), jnp.float32),
    )


if __name__ == "__main__":
    key = jax.random.PRNGKey(0)
    kp, kd, kt, km, ke = jax.random.split(key, 5)

    N, T, E = 256, 6, 128   # 2 node tiles of 128 -> exercises the parallel axis
    params = init_params(kp)

    state = jax.random.normal(kd, (N, T, STATE_SIZE), jnp.float32)
    mesh_pos = jax.random.normal(km, (N, T, 2), jnp.float32)
    type_ids = jax.random.randint(kt, (N, T), 0, NUM_TYPES)
    node_type = jax.nn.one_hot(type_ids, NUM_TYPES, dtype=jnp.float32)
    edges = jax.random.randint(ke, (E, T, 2), 0, N)
    batch_idx = jnp.zeros((N,), jnp.int32)

    state_hat, output_hat, target = eagle_forward(
        state, mesh_pos, edges, node_type, batch_idx, params, tile_n=128)
    jax.block_until_ready((state_hat, output_hat, target))

    ref_sh, ref_oh, ref_tg = eagle_forward_ref(state, node_type, params)
    assert state_hat.shape == (N, T, STATE_SIZE)
    assert output_hat.shape == (N, T - 1, STATE_SIZE)
    assert target.shape == (N, T - 1, STATE_SIZE)
    assert jnp.allclose(state_hat, ref_sh, atol=2e-4, rtol=2e-4)
    assert jnp.allclose(output_hat, ref_oh, atol=2e-4, rtol=2e-4)
    assert jnp.allclose(target, ref_tg, atol=2e-4, rtol=2e-4)

    print("KERNEL_OK")
</pallas_src>

<mosaic_0001>
module attributes {stable_mosaic.version = 11 : i64} {
  func.func @_eagle_rollout_kernel(%arg0: i32, %arg1: i32, %arg2: memref<4x128xf32, #tpu.memory_space<vmem>>, %arg3: memref<1x1x128xi32, #tpu.memory_space<vmem>>, %arg4: memref<1x1x128xi32, #tpu.memory_space<vmem>>, %arg5: memref<1x4x128xf32, #tpu.memory_space<vmem>>, %arg6: memref<64x4xf32, #tpu.memory_space<vmem>>, %arg7: memref<64x9xf32, #tpu.memory_space<vmem>>, %arg8: memref<64x1xf32, #tpu.memory_space<vmem>>, %arg9: memref<4x64xf32, #tpu.memory_space<vmem>>, %arg10: memref<4x1xf32, #tpu.memory_space<vmem>>, %arg11: memref<1x4x128xf32, #tpu.memory_space<vmem>>, %arg12: memref<1x4x128xf32, #tpu.memory_space<vmem>>, %arg13: memref<1x4x128xf32, #tpu.memory_space<vmem>>, %arg14: memref<4x128xf32, #tpu.memory_space<vmem>>) attributes {dimension_semantics = [#tpu.dimension_semantics<parallel>, #tpu.dimension_semantics<arbitrary>], iteration_bounds = array<i64: 2, 5>, scalar_prefetch = 0 : i64, scratch_operands = 1 : i64, tpu.core_type = #tpu.core_type<tc>, window_params = [{transform_indices = @transform_0, window_bounds = array<i64: 4, 128>}, {transform_indices = @transform_1, window_bounds = array<i64: 1, 1, 128>}, {transform_indices = @transform_2, window_bounds = array<i64: 1, 1, 128>}, {transform_indices = @transform_3, window_bounds = array<i64: 1, 4, 128>}, {pipeline_mode = #tpu.pipeline_mode<synchronous>, transform_indices = @transform_4, window_bounds = array<i64: 64, 4>}, {pipeline_mode = #tpu.pipeline_mode<synchronous>, transform_indices = @transform_5, window_bounds = array<i64: 64, 9>}, {pipeline_mode = #tpu.pipeline_mode<synchronous>, transform_indices = @transform_6, window_bounds = array<i64: 64, 1>}, {pipeline_mode = #tpu.pipeline_mode<synchronous>, transform_indices = @transform_7, window_bounds = array<i64: 4, 64>}, {pipeline_mode = #tpu.pipeline_mode<synchronous>, transform_indices = @transform_8, window_bounds = array<i64: 4, 1>}, {transform_indices = @transform_9, window_bounds = array<i64: 1, 4, 128>}, {transform_indices = @transform_10, window_bounds = array<i64: 1, 4, 128>}, {transform_indices = @transform_11, window_bounds = array<i64: 1, 4, 128>}]} {
    %c0_i32 = arith.constant 0 : i32
    %0 = arith.cmpi eq, %arg1, %c0_i32 : i32
    %1 = arith.extui %0 : i1 to i32
    %c0_i32_0 = arith.constant 0 : i32
    %2 = arith.cmpi ne, %1, %c0_i32_0 : i32
    scf.if %2 {
      %c0_35 = arith.constant 0 : index
      %c0_36 = arith.constant 0 : index
      %53 = vector.load %arg2[%c0_35, %c0_36] : memref<4x128xf32, #tpu.memory_space<vmem>>, vector<4x128xf32>
      %c0_37 = arith.constant 0 : index
      %c0_38 = arith.constant 0 : index
      %54 = vector.load %arg14[%c0_37, %c0_38] : memref<4x128xf32, #tpu.memory_space<vmem>>, vector<4x128xf32>
      tpu.vector_store %arg14[%c0_37, %c0_38], %53 {strides = array<i32>} : memref<4x128xf32, #tpu.memory_space<vmem>>, vector<4x128xf32>,
    } else {
    }
    %c0 = arith.constant 0 : index
    %c0_1 = arith.constant 0 : index
    %3 = vector.load %arg14[%c0, %c0_1] : memref<4x128xf32, #tpu.memory_space<vmem>>, vector<4x128xf32>
    %c0_2 = arith.constant 0 : index
    %c0_3 = arith.constant 0 : index
    %c0_4 = arith.constant 0 : index
    %4 = vector.load %arg3[%c0_2, %c0_3, %c0_4] : memref<1x1x128xi32, #tpu.memory_space<vmem>>, vector<1x1x128xi32>
    %5 = vector.shape_cast %4 : vector<1x1x128xi32> to vector<1x128xi32>
    %6 = tpu.iota {dimensions = array<i32: 0>} : vector<9x128xi32>
    %7 = vector.broadcast %5 : vector<1x128xi32> to vector<9x128xi32>
    %8 = arith.cmpi eq, %6, %7 : vector<9x128xi32>
    %9 = arith.extui %8 : vector<9x128xi1> to vector<9x128xi32>
    %10 = arith.sitofp %9 : vector<9x128xi32> to vector<9x128xf32>
    %c0_5 = arith.constant 0 : index
    %c0_6 = arith.constant 0 : index
    %11 = vector.load %arg6[%c0_5, %c0_6] : memref<64x4xf32, #tpu.memory_space<vmem>>, vector<64x4xf32>
    %cst = arith.constant dense<0.000000e+00> : vector<64x128xf32>
    %12 = tpu.matmul %11, %3, %cst {dimension_numbers = #tpu.dot_dimension_numbers<[1], [0], [0], [1], [0, 0, 1, 1], [], []>} : vector<64x4xf32>, vector<4x128xf32>, vector<64x128xf32> -> vector<64x128xf32>
    %c0_7 = arith.constant 0 : index
    %c0_8 = arith.constant 0 : index
    %13 = vector.load %arg7[%c0_7, %c0_8] : memref<64x9xf32, #tpu.memory_space<vmem>>, vector<64x9xf32>
    %cst_9 = arith.constant dense<0.000000e+00> : vector<64x128xf32>
    %14 = tpu.matmul %13, %10, %cst_9 {dimension_numbers = #tpu.dot_dimension_numbers<[1], [0], [0], [1], [0, 0, 1, 1], [], []>} : vector<64x9xf32>, vector<9x128xf32>, vector<64x128xf32> -> vector<64x128xf32>
    %15 = arith.addf %12, %14 : vector<64x128xf32>
    %c0_10 = arith.constant 0 : index
    %c0_11 = arith.constant 0 : index
    %16 = vector.load %arg8[%c0_10, %c0_11] : memref<64x1xf32, #tpu.memory_space<vmem>>, vector<64x1xf32>
    %17 = vector.broadcast %16 : vector<64x1xf32> to vector<64x128xf32>
    %18 = arith.addf %15, %17 : vector<64x128xf32>
    %cst_12 = arith.constant 0.000000e+00 : f32
    %19 = vector.broadcast %cst_12 : f32 to vector<64x128xf32>
    %20 = arith.maximumf %18, %19 : vector<64x128xf32>
    %c0_13 = arith.constant 0 : index
    %c0_14 = arith.constant 0 : index
    %21 = vector.load %arg9[%c0_13, %c0_14] : memref<4x64xf32, #tpu.memory_space<vmem>>, vector<4x64xf32>
    %cst_15 = arith.constant dense<0.000000e+00> : vector<4x128xf32>
    %22 = tpu.matmul %21, %20, %cst_15 {dimension_numbers = #tpu.dot_dimension_numbers<[1], [0], [0], [1], [0, 0, 1, 1], [], []>} : vector<4x64xf32>, vector<64x128xf32>, vector<4x128xf32> -> vector<4x128xf32>
    %c0_16 = arith.constant 0 : index
    %c0_17 = arith.constant 0 : index
    %23 = vector.load %arg10[%c0_16, %c0_17] : memref<4x1xf32, #tpu.memory_space<vmem>>, vector<4x1xf32>
    %24 = vector.broadcast %23 : vector<4x1xf32> to vector<4x128xf32>
    %25 = arith.addf %22, %24 : vector<4x128xf32>
    %c0_18 = arith.constant 0 : index
    %c0_19 = arith.constant 0 : index
    %c0_20 = arith.constant 0 : index
    %26 = vector.load %arg5[%c0_18, %c0_19, %c0_20] : memref<1x4x128xf32, #tpu.memory_space<vmem>>, vector<1x4x128xf32>
    %27 = vector.shape_cast %26 : vector<1x4x128xf32> to vector<4x128xf32>
    %28 = arith.addf %3, %25 : vector<4x128xf32>
    %29 = arith.subf %27, %3 : vector<4x128xf32>
    %c0_21 = arith.constant 0 : index
    %c0_22 = arith.constant 0 : index
    %c0_23 = arith.constant 0 : index
    %30 = vector.load %arg4[%c0_21, %c0_22, %c0_23] : memref<1x1x128xi32, #tpu.memory_space<vmem>>, vector<1x1x128xi32>
    %31 = vector.shape_cast %30 : vector<1x1x128xi32> to vector<1x128xi32>
    %c4_i32 = arith.constant 4 : i32
    %32 = vector.broadcast %c4_i32 : i32 to vector<1x128xi32>
    %33 = arith.cmpi eq, %31, %32 : vector<1x128xi32>
    %c6_i32 = arith.constant 6 : i32
    %34 = vector.broadcast %c6_i32 : i32 to vector<1x128xi32>
    %35 = arith.cmpi eq, %31, %34 : vector<1x128xi32>
    %36 = arith.ori %33, %35 : vector<1x128xi1>
    %c2_i32 = arith.constant 2 : i32
    %37 = vector.broadcast %c2_i32 : i32 to vector<1x128xi32>
    %38 = arith.cmpi eq, %31, %37 : vector<1x128xi32>
    %39 = arith.ori %36, %38 : vector<1x128xi1>
    %40 = vector.shape_cast %39 : vector<1x128xi1> to vector<1x128xi1>
    %41 = vector.broadcast %40 : vector<1x128xi1> to vector<4x128xi1>
    %42 = arith.select %41, %27, %28 : vector<4x128xi1>, vector<4x128xf32>
    %c0_24 = arith.constant 0 : index
    %c0_25 = arith.constant 0 : index
    %c0_26 = arith.constant 0 : index
    %43 = vector.load %arg11[%c0_24, %c0_25, %c0_26] : memref<1x4x128xf32, #tpu.memory_space<vmem>>, vector<1x4x128xf32>
    %44 = vector.shape_cast %43 : vector<1x4x128xf32> to vector<4x128xf32>
    %45 = vector.shape_cast %25 : vector<4x128xf32> to vector<1x4x128xf32>
    tpu.vector_store %arg11[%c0_24, %c0_25, %c0_26], %45 {strides = array<i32>} : memref<1x4x128xf32, #tpu.memory_space<vmem>>, vector<1x4x128xf32>,
    %c0_27 = arith.constant 0 : index
    %c0_28 = arith.constant 0 : index
    %c0_29 = arith.constant 0 : index
    %46 = vector.load %arg12[%c0_27, %c0_28, %c0_29] : memref<1x4x128xf32, #tpu.memory_space<vmem>>, vector<1x4x128xf32>
    %47 = vector.shape_cast %46 : vector<1x4x128xf32> to vector<4x128xf32>
    %48 = vector.shape_cast %42 : vector<4x128xf32> to vector<1x4x128xf32>
    tpu.vector_store %arg12[%c0_27, %c0_28, %c0_29], %48 {strides = array<i32>} : memref<1x4x128xf32, #tpu.memory_space<vmem>>, vector<1x4x128xf32>,
    %c0_30 = arith.constant 0 : index
    %c0_31 = arith.constant 0 : index
    %c0_32 = arith.constant 0 : index
    %49 = vector.load %arg13[%c0_30, %c0_31, %c0_32] : memref<1x4x128xf32, #tpu.memory_space<vmem>>, vector<1x4x128xf32>
    %50 = vector.shape_cast %49 : vector<1x4x128xf32> to vector<4x128xf32>
    %51 = vector.shape_cast %29 : vector<4x128xf32> to vector<1x4x128xf32>
    tpu.vector_store %arg13[%c0_30, %c0_31, %c0_32], %51 {strides = array<i32>} : memref<1x4x128xf32, #tpu.memory_space<vmem>>, vector<1x4x128xf32>,
    %c0_33 = arith.constant 0 : index
    %c0_34 = arith.constant 0 : index
    %52 = vector.load %arg14[%c0_33, %c0_34] : memref<4x128xf32, #tpu.memory_space<vmem>>, vector<4x128xf32>
    tpu.vector_store %arg14[%c0_33, %c0_34], %42 {strides = array<i32>} : memref<4x128xf32, #tpu.memory_space<vmem>>, vector<4x128xf32>,
    return
  }
  func.func @transform_0(%arg0: i32, %arg1: i32) -> (i32, i32) {
    %c0_i32 = arith.constant 0 : i32
    %c0_i32_0 = arith.constant 0 : i32
    return %c0_i32, %arg0 : i32, i32
  }
  func.func @transform_1(%arg0: i32, %arg1: i32) -> (i32, i32, i32) {
    %c0_i32 = arith.constant 0 : i32
    %0 = arith.addi %arg1, %c0_i32 : i32
    %c0_i32_0 = arith.constant 0 : i32
    %c0_i32_1 = arith.constant 0 : i32
    return %0, %c0_i32_0, %arg0 : i32, i32, i32
  }
  func.func @transform_2(%arg0: i32, %arg1: i32) -> (i32, i32, i32) {
    %c1_i32 = arith.constant 1 : i32
    %0 = arith.addi %arg1, %c1_i32 : i32
    %c0_i32 = arith.constant 0 : i32
    %c0_i32_0 = arith.constant 0 : i32
    return %0, %c0_i32, %arg0 : i32, i32, i32
  }
  func.func @transform_3(%arg0: i32, %arg1: i32) -> (i32, i32, i32) {
    %c1_i32 = arith.constant 1 : i32
    %0 = arith.addi %arg1, %c1_i32 : i32
    %c0_i32 = arith.constant 0 : i32
    %c0_i32_0 = arith.constant 0 : i32
    return %0, %c0_i32, %arg0 : i32, i32, i32
  }
  func.func @transform_4(%arg0: i32, %arg1: i32) -> (i32, i32) {
    %c0_i32 = arith.constant 0 : i32
    %c0_i32_0 = arith.constant 0 : i32
    %c0_i32_1 = arith.constant 0 : i32
    return %c0_i32, %c0_i32_0 : i32, i32
  }
  func.func @transform_5(%arg0: i32, %arg1: i32) -> (i32, i32) {
    %c0_i32 = arith.constant 0 : i32
    %c0_i32_0 = arith.constant 0 : i32
    %c0_i32_1 = arith.constant 0 : i32
    return %c0_i32, %c0_i32_0 : i32, i32
  }
  func.func @transform_6(%arg0: i32, %arg1: i32) -> (i32, i32) {
    %c0_i32 = arith.constant 0 : i32
    %c0_i32_0 = arith.constant 0 : i32
    %c0_i32_1 = arith.constant 0 : i32
    return %c0_i32, %c0_i32_0 : i32, i32
  }
  func.func @transform_7(%arg0: i32, %arg1: i32) -> (i32, i32) {
    %c0_i32 = arith.constant 0 : i32
    %c0_i32_0 = arith.constant 0 : i32
    %c0_i32_1 = arith.constant 0 : i32
    return %c0_i32, %c0_i32_0 : i32, i32
  }
  func.func @transform_8(%arg0: i32, %arg1: i32) -> (i32, i32) {
    %c0_i32 = arith.constant 0 : i32
    %c0_i32_0 = arith.constant 0 : i32
    %c0_i32_1 = arith.constant 0 : i32
    return %c0_i32, %c0_i32_0 : i32, i32
  }
  func.func @transform_9(%arg0: i32, %arg1: i32) -> (i32, i32, i32) {
    %c0_i32 = arith.constant 0 : i32
    %0 = arith.addi %arg1, %c0_i32 : i32
    %c0_i32_0 = arith.constant 0 : i32
    %c0_i32_1 = arith.constant 0 : i32
    return %0, %c0_i32_0, %arg0 : i32, i32, i32
  }
  func.func @transform_10(%arg0: i32, %arg1: i32) -> (i32, i32, i32) {
    %c0_i32 = arith.constant 0 : i32
    %0 = arith.addi %arg1, %c0_i32 : i32
    %c0_i32_0 = arith.constant 0 : i32
    %c0_i32_1 = arith.constant 0 : i32
    return %0, %c0_i32_0, %arg0 : i32, i32, i32
  }
  func.func @transform_11(%arg0: i32, %arg1: i32) -> (i32, i32, i32) {
    %c0_i32 = arith.constant 0 : i32
    %0 = arith.addi %arg1, %c0_i32 : i32
    %c0_i32_0 = arith.constant 0 : i32
    %c0_i32_1 = arith.constant 0 : i32
    return %0, %c0_i32_0, %arg0 : i32, i32, i32
  }
}

</mosaic_0001>

<llo_original>
// kernel: eagle_forward.1
$region0: #{eagle_forward.1}
  #allocation0 [shape = 'u32[]', space=smem, size = 0x4, offset = 0x4, fixed_abs, tag = 'smem constant byte address 0x4 - core index']
  #allocation1 [shape = 'u32[144,128]{1,0:T(1,128)}', space=vmem, size = 0x12000, scoped, tag = 'internal scratch']
  #allocation2 [shape = 'f32[4,128]{1,0:T(4,128)}', space=vmem, size = 0x800, scoped, tag = 'scratch operand']
  %s0 = inlined_call_operand.vmem [shape: f32[4,256], index: 0, kind: input, shape index: {}]
  %s1 = inlined_call_operand.vmem [shape: s32[6,1,256], index: 1, kind: input, shape index: {}, may-alias: {1,2}]
  %s2 = inlined_call_operand.vmem [shape: s32[6,1,256], index: 2, kind: input, shape index: {}, may-alias: {1,2}]
  %s3 = inlined_call_operand.vmem [shape: f32[6,4,256], index: 3, kind: input, shape index: {}]
  %s4 = inlined_call_operand.vmem [shape: f32[64,4], index: 4, kind: input, shape index: {}]
  %s5 = inlined_call_operand.vmem [shape: f32[64,9], index: 5, kind: input, shape index: {}]
  %s6 = inlined_call_operand.vmem [shape: f32[64,1], index: 6, kind: input, shape index: {}]
  %s7 = inlined_call_operand.vmem [shape: f32[4,64], index: 7, kind: input, shape index: {}]
  %s8 = inlined_call_operand.vmem [shape: f32[4,1], index: 8, kind: input, shape index: {}]
  %s9 = inlined_call_operand.hbm [shape: f32[5,4,256], index: 9, kind: output, shape index: {0}]
  %s10 = inlined_call_operand.vmem [shape: f32[5,4,256], index: 10, kind: output, shape index: {1}]
  %s11 = inlined_call_operand.hbm [shape: f32[5,4,256], index: 11, kind: output, shape index: {2}]
  %12 = xla_tuple %s9, %s10, %s11
  %s13 = sld [smem:[#allocation0]]
  $region89: #{eagle_forward.1} parent=0
    _
  %s15 = ssub.s32 1, %s13
  %s16 = scalar_select 0, %s15, %s13
  $region1: #{eagle_forward.1} parent=0
    #allocation3 [shape = 'u8[4096]{0}', space=vmem, size = 0x1000, scoped, tag = 'output window, operand 0']
    #allocation4 [shape = 's32[2]{0}', space=sflag, size = 0x8, scoped, tag = 'scoped memory for eagle_forward.1']
    #allocation5 [shape = 'u8[4096]{0}', space=vmem, size = 0x1000, scoped, tag = 'output window, operand 2']
    #allocation6 [shape = 's32[2]{0}', space=sflag, size = 0x8, scoped, tag = 'scoped memory for eagle_forward.1']
    %17 = vsyncpa [#allocation4], 0
    %s18 = scalar_lea.sflag [#allocation4], 1
    %19 = vsyncpa %s18, 0
    %20 = vsyncpa [#allocation6], 0
    %s21 = scalar_lea.sflag [#allocation6], 1
    %22 = vsyncpa %s21, 0
    loop: start=0, step=1, limit=12
    $region2: #{eagle_forward.1} parent=1 // loop_pre_header
      _
    $region3: #{eagle_forward.1} parent=1 // loop_header
      %s24 = sphi 0, %s28
      %p25 = scmp.ge.s32.totalorder %s24, 12
      %s31 = sphi 0, %s43
      %s32 = sphi 0, %s39
      %s33 = sphi 0, %s31
      %s34 = sphi 0, %s32
      %s35 = sphi 0, %s33
      %s36 = sphi 0, %s34
      %s46 = sphi 0, %s48
      %s49 = sphi 0, %s46
      %s50 = sphi 0, %s49
      %s66 = sphi 0, %s50
      %s74 = sphi 0, %s76
      %s77 = sphi 0, %s74
      %s78 = sphi 0, %s77
      %s94 = sphi 0, %s78
      %s104 = sphi 0, %s106
      %s107 = sphi 0, %s104
      %s108 = sphi 0, %s107
      %s124 = sphi 0, %s108
      %s134 = sphi 0, %s136
      %s137 = sphi 0, %s134
      %s138 = sphi 0, %s137
      %s154 = sphi 0, %s138
      %s158 = sphi 0, %s158
      %s160 = sphi 0, %s158
      %s161 = sphi 0, %s160
      %s175 = sphi 0, %s161
      %s179 = sphi 0, %s179
      %s181 = sphi 0, %s179
      %s182 = sphi 0, %s181
      %s196 = sphi 0, %s182
      %s200 = sphi 0, %s200
      %s202 = sphi 0, %s200
      %s203 = sphi 0, %s202
      %s217 = sphi 0, %s203
      %s221 = sphi 0, %s221
      %s223 = sphi 0, %s221
      %s224 = sphi 0, %s223
      %s238 = sphi 0, %s224
      %s242 = sphi 0, %s242
      %s244 = sphi 0, %s242
      %s245 = sphi 0, %s244
      %s259 = sphi 0, %s245
      %s267 = sphi 0, %s269
      %s270 = sphi 0, %s267
      %s271 = sphi 0, %s270
      %s287 = sphi 0, %s271
      %s295 = sphi 0, %s297
      %s298 = sphi 0, %s295
      %s299 = sphi 0, %s298
      %s315 = sphi 0, %s299
      %s323 = sphi 0, %s325
      %s326 = sphi 0, %s323
      %s327 = sphi 0, %s326
      %s343 = sphi 0, %s327
    $region4: #{eagle_forward.1} parent=1 // loop_header_branch
      %27 = sbr.rel (%p25) target = $region8
    $region5: #{eagle_forward.1} parent=1 // loop_body
      %s29 = ssub.s32 %s24, 1
      %s30 = ssub.s32 %s24, 2
      %s37 = sadd.s32 1, %s32
      %p38 = scmp.ge.s32.totalorder %s37, 5
      %s39 = scalar_select %p38, 0, %s37
      %s40 = sadd.s32 1, %s31
      %s41 = scalar_select %p38, %s40, %s31
      %p42 = scmp.ge.s32.totalorder %s41, 2
      %s43 = scalar_select %p42, 0, %s41
      %s44 = ssub.s32 %s31, %s43
      %p45 = scmp.eq.s32.totalorder %s44, 0
      %s47 = sadd.s32 %s46, 1
      %s48 = scalar_select %p45, %s46, %s47
      %p51 = pneg %p45
      %p52 = scmp.eq.s32.totalorder %s24, 9
      %p53 = por %p51, %p52
      %p54 = scmp.ne.s32.totalorder %s46, %s49
      %p55 = scmp.eq.s32.totalorder %s24, 0
      %p56 = por %p54, %p55
      %p57 = scmp.ne.s32.totalorder %s46, %s49
      %p58 = scmp.eq.s32.totalorder %s29, 9
      %p59 = por %p57, %p58
      %p60 = scmp.ne.s32.totalorder %s49, %s50
      %p61 = scmp.eq.s32.totalorder %s29, 0
      %p62 = por %p60, %p61
      %p63 = scmp.ne.s32.totalorder %s49, %s50
      %p64 = scmp.eq.s32.totalorder %s30, 9
      %p65 = por %p63, %p64
      %p67 = scmp.ne.s32.totalorder %s50, %s66
      %p68 = scmp.eq.s32.totalorder %s30, 0
      %p69 = por %p67, %p68
      %s70 = ssub.s32 %s32, %s39
      %s71 = ssub.s32 %s31, %s43
      %s72 = sor.u32 %s70, %s71
      %p73 = scmp.eq.s32.totalorder %s72, 0
      %s75 = sadd.s32 %s74, 1
      %s76 = scalar_select %p73, %s74, %s75
      %p79 = pneg %p73
      %p80 = scmp.eq.s32.totalorder %s24, 9
      %p81 = por %p79, %p80
      %p82 = scmp.ne.s32.totalorder %s74, %s77
      %p83 = scmp.eq.s32.totalorder %s24, 0
      %p84 = por %p82, %p83
      %p85 = scmp.ne.s32.totalorder %s74, %s77
      %p86 = scmp.eq.s32.totalorder %s29, 9
      %p87 = por %p85, %p86
      %p88 = scmp.ne.s32.totalorder %s77, %s78
      %p89 = scmp.eq.s32.totalorder %s29, 0
      %p90 = por %p88, %p89
      %p91 = scmp.ne.s32.totalorder %s77, %s78
      %p92 = scmp.eq.s32.totalorder %s30, 9
      %p93 = por %p91, %p92
      %p95 = scmp.ne.s32.totalorder %s78, %s94
      %p96 = scmp.eq.s32.totalorder %s30, 0
      %p97 = por %p95, %p96
      %s98 = sadd.s32 %s32, 1
      %s99 = sadd.s32 %s39, 1
      %s100 = ssub.s32 %s98, %s99
      %s101 = ssub.s32 %s31, %s43
      %s102 = sor.u32 %s100, %s101
      %p103 = scmp.eq.s32.totalorder %s102, 0
      %s105 = sadd.s32 %s104, 1
      %s106 = scalar_select %p103, %s104, %s105
      %p109 = pneg %p103
      %p110 = scmp.eq.s32.totalorder %s24, 9
      %p111 = por %p109, %p110
      %p112 = scmp.ne.s32.totalorder %s104, %s107
      %p113 = scmp.eq.s32.totalorder %s24, 0
      %p114 = por %p112, %p113
      %p115 = scmp.ne.s32.totalorder %s104, %s107
      %p116 = scmp.eq.s32.totalorder %s29, 9
      %p117 = por %p115, %p116
      %p118 = scmp.ne.s32.totalorder %s107, %s108
      %p119 = scmp.eq.s32.totalorder %s29, 0
      %p120 = por %p118, %p119
      %p121 = scmp.ne.s32.totalorder %s107, %s108
      %p122 = scmp.eq.s32.totalorder %s30, 9
      %p123 = por %p121, %p122
      %p125 = scmp.ne.s32.totalorder %s108, %s124
      %p126 = scmp.eq.s32.totalorder %s30, 0
      %p127 = por %p125, %p126
      %s128 = sadd.s32 %s32, 1
      %s129 = sadd.s32 %s39, 1
      %s130 = ssub.s32 %s128, %s129
      %s131 = ssub.s32 %s31, %s43
      %s132 = sor.u32 %s130, %s131
      %p133 = scmp.eq.s32.totalorder %s132, 0
      %s135 = sadd.s32 %s134, 1
      %s136 = scalar_select %p133, %s134, %s135
      %p139 = pneg %p133
      %p140 = scmp.eq.s32.totalorder %s24, 9
      %p141 = por %p139, %p140
      %p142 = scmp.ne.s32.totalorder %s134, %s137
      %p143 = scmp.eq.s32.totalorder %s24, 0
      %p144 = por %p142, %p143
      %p145 = scmp.ne.s32.totalorder %s134, %s137
      %p146 = scmp.eq.s32.totalorder %s29, 9
      %p147 = por %p145, %p146
      %p148 = scmp.ne.s32.totalorder %s137, %s138
      %p149 = scmp.eq.s32.totalorder %s29, 0
      %p150 = por %p148, %p149
      %p151 = scmp.ne.s32.totalorder %s137, %s138
      %p152 = scmp.eq.s32.totalorder %s30, 9
      %p153 = por %p151, %p152
      %p155 = scmp.ne.s32.totalorder %s138, %s154
      %p156 = scmp.eq.s32.totalorder %s30, 0
      %p157 = por %p155, %p156
      %s159 = sadd.s32 %s158, 1
      %p162 = scmp.eq.s32.totalorder %s24, 9
      %p163 = scmp.ne.s32.totalorder %s158, %s160
      %p164 = scmp.eq.s32.totalorder %s24, 0
      %p165 = por %p163, %p164
      %p166 = scmp.ne.s32.totalorder %s158, %s160
      %p167 = scmp.eq.s32.totalorder %s29, 9
      %p168 = por %p166, %p167
      %p169 = scmp.ne.s32.totalorder %s160, %s161
      %p170 = scmp.eq.s32.totalorder %s29, 0
      %p171 = por %p169, %p170
      %p172 = scmp.ne.s32.totalorder %s160, %s161
      %p173 = scmp.eq.s32.totalorder %s30, 9
      %p174 = por %p172, %p173
      %p176 = scmp.ne.s32.totalorder %s161, %s175
      %p177 = scmp.eq.s32.totalorder %s30, 0
      %p178 = por %p176, %p177
      %s180 = sadd.s32 %s179, 1
      %p183 = scmp.eq.s32.totalorder %s24, 9
      %p184 = scmp.ne.s32.totalorder %s179, %s181
      %p185 = scmp.eq.s32.totalorder %s24, 0
      %p186 = por %p184, %p185
      %p187 = scmp.ne.s32.totalorder %s179, %s181
      %p188 = scmp.eq.s32.totalorder %s29, 9
      %p189 = por %p187, %p188
      %p190 = scmp.ne.s32.totalorder %s181, %s182
      %p191 = scmp.eq.s32.totalorder %s29, 0
      %p192 = por %p190, %p191
      %p193 = scmp.ne.s32.totalorder %s181, %s182
      %p194 = scmp.eq.s32.totalorder %s30, 9
      %p195 = por %p193, %p194
      %p197 = scmp.ne.s32.totalorder %s182, %s196
      %p198 = scmp.eq.s32.totalorder %s30, 0
      %p199 = por %p197, %p198
      %s201 = sadd.s32 %s200, 1
      %p204 = scmp.eq.s32.totalorder %s24, 9
      %p205 = scmp.ne.s32.totalorder %s200, %s202
      %p206 = scmp.eq.s32.totalorder %s24, 0
      %p207 = por %p205, %p206
      %p208 = scmp.ne.s32.totalorder %s200, %s202
      %p209 = scmp.eq.s32.totalorder %s29, 9
      %p210 = por %p208, %p209
      %p211 = scmp.ne.s32.totalorder %s202, %s203
      %p212 = scmp.eq.s32.totalorder %s29, 0
      %p213 = por %p211, %p212
      %p214 = scmp.ne.s32.totalorder %s202, %s203
      %p215 = scmp.eq.s32.totalorder %s30, 9
      %p216 = por %p214, %p215
      %p218 = scmp.ne.s32.totalorder %s203, %s217
      %p219 = scmp.eq.s32.totalorder %s30, 0
      %p220 = por %p218, %p219
      %s222 = sadd.s32 %s221, 1
      %p225 = scmp.eq.s32.totalorder %s24, 9
      %p226 = scmp.ne.s32.totalorder %s221, %s223
      %p227 = scmp.eq.s32.totalorder %s24, 0
      %p228 = por %p226, %p227
      %p229 = scmp.ne.s32.totalorder %s221, %s223
      %p230 = scmp.eq.s32.totalorder %s29, 9
      %p231 = por %p229, %p230
      %p232 = scmp.ne.s32.totalorder %s223, %s224
      %p233 = scmp.eq.s32.totalorder %s29, 0
      %p234 = por %p232, %p233
      %p235 = scmp.ne.s32.totalorder %s223, %s224
      %p236 = scmp.eq.s32.totalorder %s30, 9
      %p237 = por %p235, %p236
      %p239 = scmp.ne.s32.totalorder %s224, %s238
      %p240 = scmp.eq.s32.totalorder %s30, 0
      %p241 = por %p239, %p240
      %s243 = sadd.s32 %s242, 1
      %p246 = scmp.eq.s32.totalorder %s24, 9
      %p247 = scmp.ne.s32.totalorder %s242, %s244
      %p248 = scmp.eq.s32.totalorder %s24, 0
      %p249 = por %p247, %p248
      %p250 = scmp.ne.s32.totalorder %s242, %s244
      %p251 = scmp.eq.s32.totalorder %s29, 9
      %p252 = por %p250, %p251
      %p253 = scmp.ne.s32.totalorder %s244, %s245
      %p254 = scmp.eq.s32.totalorder %s29, 0
      %p255 = por %p253, %p254
      %p256 = scmp.ne.s32.totalorder %s244, %s245
      %p257 = scmp.eq.s32.totalorder %s30, 9
      %p258 = por %p256, %p257
      %p260 = scmp.ne.s32.totalorder %s245, %s259
      %p261 = scmp.eq.s32.totalorder %s30, 0
      %p262 = por %p260, %p261
      %s263 = ssub.s32 %s32, %s39
      %s264 = ssub.s32 %s31, %s43
      %s265 = sor.u32 %s263, %s264
      %p266 = scmp.eq.s32.totalorder %s265, 0
      %s268 = sadd.s32 %s267, 1
      %s269 = scalar_select %p266, %s267, %s268
      %p272 = pneg %p266
      %p273 = scmp.eq.s32.totalorder %s24, 9
      %p274 = por %p272, %p273
      %p275 = scmp.ne.s32.totalorder %s267, %s270
      %p276 = scmp.eq.s32.totalorder %s24, 0
      %p277 = por %p275, %p276
      %p278 = scmp.ne.s32.totalorder %s267, %s270
      %p279 = scmp.eq.s32.totalorder %s29, 9
      %p280 = por %p278, %p279
      %p281 = scmp.ne.s32.totalorder %s270, %s271
      %p282 = scmp.eq.s32.totalorder %s29, 0
      %p283 = por %p281, %p282
      %p284 = scmp.ne.s32.totalorder %s270, %s271
      %p285 = scmp.eq.s32.totalorder %s30, 9
      %p286 = por %p284, %p285
      %p288 = scmp.ne.s32.totalorder %s271, %s287
      %p289 = scmp.eq.s32.totalorder %s30, 0
      %p290 = por %p288, %p289
      %s291 = ssub.s32 %s32, %s39
      %s292 = ssub.s32 %s31, %s43
      %s293 = sor.u32 %s291, %s292
      %p294 = scmp.eq.s32.totalorder %s293, 0
      %s296 = sadd.s32 %s295, 1
      %s297 = scalar_select %p294, %s295, %s296
      %p300 = pneg %p294
      %p301 = scmp.eq.s32.totalorder %s24, 9
      %p302 = por %p300, %p301
      %p303 = scmp.ne.s32.totalorder %s295, %s298
      %p304 = scmp.eq.s32.totalorder %s24, 0
      %p305 = por %p303, %p304
      %p306 = scmp.ne.s32.totalorder %s295, %s298
      %p307 = scmp.eq.s32.totalorder %s29, 9
      %p308 = por %p306, %p307
      %p309 = scmp.ne.s32.totalorder %s298, %s299
      %p310 = scmp.eq.s32.totalorder %s29, 0
      %p311 = por %p309, %p310
      %p312 = scmp.ne.s32.totalorder %s298, %s299
      %p313 = scmp.eq.s32.totalorder %s30, 9
      %p314 = por %p312, %p313
      %p316 = scmp.ne.s32.totalorder %s299, %s315
      %p317 = scmp.eq.s32.totalorder %s30, 0
      %p318 = por %p316, %p317
      %s319 = ssub.s32 %s32, %s39
      %s320 = ssub.s32 %s31, %s43
      %s321 = sor.u32 %s319, %s320
      %p322 = scmp.eq.s32.totalorder %s321, 0
      %s324 = sadd.s32 %s323, 1
      %s325 = scalar_select %p322, %s323, %s324
      %p328 = pneg %p322
      %p329 = scmp.eq.s32.totalorder %s24, 9
      %p330 = por %p328, %p329
      %p331 = scmp.ne.s32.totalorder %s323, %s326
      %p332 = scmp.eq.s32.totalorder %s24, 0
      %p333 = por %p331, %p332
      %p334 = scmp.ne.s32.totalorder %s323, %s326
      %p335 = scmp.eq.s32.totalorder %s29, 9
      %p336 = por %p334, %p335
      %p337 = scmp.ne.s32.totalorder %s326, %s327
      %p338 = scmp.eq.s32.totalorder %s29, 0
      %p339 = por %p337, %p338
      %p340 = scmp.ne.s32.totalorder %s326, %s327
      %p341 = scmp.eq.s32.totalorder %s30, 9
      %p342 = por %p340, %p341
      %p344 = scmp.ne.s32.totalorder %s327, %s343
      %p345 = scmp.eq.s32.totalorder %s30, 0
      %p346 = por %p344, %p345
      %p347 = scmp.le.s32.totalorder 1, %s24
      %p348 = scmp.lt.s32.totalorder %s24, 11
      %p349 = pnand %p347, %p348
      %p350 = pneg %p349
      // Predicated region
      $region9: #{eagle_forward.1} parent=5 // pred_check
        _
      $region10: #{eagle_forward.1} parent=5 // pred_check_branch
        %352 = sbr.rel (%p349) target = $region12
      $region11: #{eagle_forward.1} parent=5 // pred_region
        %s353 = ssub.s32 %s24, 1
        // Predicated region
        $region13: #{eagle_forward.1} parent=11 // pred_check
          %p354 = pneg %p171
        $region14: #{eagle_forward.1} parent=11 // pred_check_branch
          %356 = sbr.rel (%p354) target = $region16
        $region15: #{eagle_forward.1} parent=11 // pred_region
          _
        $region16: #{eagle_forward.1} parent=11 // pred_fallthru
          _
        // Predicated region
        $region17: #{eagle_forward.1} parent=11 // pred_check
          %p357 = pneg %p192
        $region18: #{eagle_forward.1} parent=11 // pred_check_branch
          %359 = sbr.rel (%p357) target = $region20
        $region19: #{eagle_forward.1} parent=11 // pred_region
          _
        $region20: #{eagle_forward.1} parent=11 // pred_fallthru
          _
        // Predicated region
        $region21: #{eagle_forward.1} parent=11 // pred_check
          %p360 = pneg %p213
        $region22: #{eagle_forward.1} parent=11 // pred_check_branch
          %362 = sbr.rel (%p360) target = $region24
        $region23: #{eagle_forward.1} parent=11 // pred_region
          _
        $region24: #{eagle_forward.1} parent=11 // pred_fallthru
          _
        // Predicated region
        $region25: #{eagle_forward.1} parent=11 // pred_check
          %p363 = pneg %p234
        $region26: #{eagle_forward.1} parent=11 // pred_check_branch
          %365 = sbr.rel (%p363) target = $region28
        $region27: #{eagle_forward.1} parent=11 // pred_region
          _
        $region28: #{eagle_forward.1} parent=11 // pred_fallthru
          _
        // Predicated region
        $region29: #{eagle_forward.1} parent=11 // pred_check
          %p366 = pneg %p255
        $region30: #{eagle_forward.1} parent=11 // pred_check_branch
          %368 = sbr.rel (%p366) target = $region32
        $region31: #{eagle_forward.1} parent=11 // pred_region
          _
        $region32: #{eagle_forward.1} parent=11 // pred_fallthru
          _
      $region12: #{eagle_forward.1} parent=5 // pred_fallthru
        _
      %p369 = scmp.lt.s32.totalorder %s24, 10
      // Predicated region
      $region33: #{eagle_forward.1} parent=5 // pred_check
        %p370 = pneg %p369
      $region34: #{eagle_forward.1} parent=5 // pred_check_branch
        %372 = sbr.rel (%p370) target = $region36
      $region35: #{eagle_forward.1} parent=5 // pred_region
        // Predicated region
        $region37: #{eagle_forward.1} parent=35 // pred_check
          %p373 = pneg %p56
        $region38: #{eagle_forward.1} parent=35 // pred_check_branch
          %375 = sbr.rel (%p373) target = $region40
        $region39: #{eagle_forward.1} parent=35 // pred_region
          %p376 = scmp.lt.s32.totalorder %s31, 1
          %s377 = scalar_select %p376, %s31, 1
          %s378 = smul.addr %s377, 4
          %s379 = scalar_lea.vmem %s0, %s378
        $region40: #{eagle_forward.1} parent=35 // pred_fallthru
          _
        // Predicated region
        $region41: #{eagle_forward.1} parent=35 // pred_check
          %p380 = pneg %p84
        $region42: #{eagle_forward.1} parent=35 // pred_check_branch
          %382 = sbr.rel (%p380) target = $region44
        $region43: #{eagle_forward.1} parent=35 // pred_region
          %p383 = scmp.lt.s32.totalorder %s32, 5
          %s384 = scalar_select %p383, %s32, 5
          %p385 = scmp.lt.s32.totalorder %s31, 1
          %s386 = scalar_select %p385, %s31, 1
          %s387 = smul.addr %s384, 2
          %s388 = sadd.s32 %s386, %s387
          %s389 = scalar_lea.vmem %s1, %s388
        $region44: #{eagle_forward.1} parent=35 // pred_fallthru
          _
        // Predicated region
        $region45: #{eagle_forward.1} parent=35 // pred_check
          %p390 = pneg %p114
        $region46: #{eagle_forward.1} parent=35 // pred_check_branch
          %392 = sbr.rel (%p390) target = $region48
        $region47: #{eagle_forward.1} parent=35 // pred_region
          %s393 = sadd.s32 %s32, 1
          %p394 = scmp.lt.s32.totalorder %s393, 5
          %s395 = scalar_select %p394, %s393, 5
          %p396 = scmp.lt.s32.totalorder %s31, 1
          %s397 = scalar_select %p396, %s31, 1
          %s398 = smul.addr %s395, 2
          %s399 = sadd.s32 %s397, %s398
          %s400 = scalar_lea.vmem %s2, %s399
          %s401 = sadd.s32 %s32, 1
        $region48: #{eagle_forward.1} parent=35 // pred_fallthru
          _
        // Predicated region
        $region49: #{eagle_forward.1} parent=35 // pred_check
          %p402 = pneg %p144
        $region50: #{eagle_forward.1} parent=35 // pred_check_branch
          %404 = sbr.rel (%p402) target = $region52
        $region51: #{eagle_forward.1} parent=35 // pred_region
          %s405 = sadd.s32 %s32, 1
          %p406 = scmp.lt.s32.totalorder %s405, 5
          %s407 = scalar_select %p406, %s405, 5
          %p408 = scmp.lt.s32.totalorder %s31, 1
          %s409 = scalar_select %p408, %s31, 1
          %s410 = smul.addr %s407, 2
          %s411 = sadd.s32 %s409, %s410
          %s412 = smul.addr %s411, 4
          %s413 = scalar_lea.vmem %s3, %s412
          %s414 = sadd.s32 %s32, 1
        $region52: #{eagle_forward.1} parent=35 // pred_fallthru
          _
      $region36: #{eagle_forward.1} parent=5 // pred_fallthru
        _
      %p415 = scmp.le.s32.totalorder 1, %s24
      %p416 = scmp.lt.s32.totalorder %s24, 11
      %p417 = pnand %p415, %p416
      %p418 = pneg %p417
      // Predicated region
      $region53: #{eagle_forward.1} parent=5 // pred_check
        _
      $region54: #{eagle_forward.1} parent=5 // pred_check_branch
        %420 = sbr.rel (%p417) target = $region56
      $region55: #{eagle_forward.1} parent=5 // pred_region
        %s421 = ssub.s32 %s24, 1
        %p422 = scmp.lt.s32.totalorder %s33, 1
        %s423 = scalar_select %p422, %s33, 1
        %s424 = smul.addr %s423, 4
        %s425 = scalar_lea.vmem %s0, %s424
        %p426 = pneg %p62
        %p427 = pneg %p59
        %p428 = scmp.lt.s32.totalorder %s34, 5
        %s429 = scalar_select %p428, %s34, 5
        %p430 = scmp.lt.s32.totalorder %s33, 1
        %s431 = scalar_select %p430, %s33, 1
        %s432 = smul.addr %s429, 2
        %s433 = sadd.s32 %s431, %s432
        %s434 = scalar_lea.vmem %s1, %s433
        %p435 = pneg %p90
        %p436 = pneg %p87
        %s437 = sadd.s32 %s34, 1
        %p438 = scmp.lt.s32.totalorder %s437, 5
        %s439 = scalar_select %p438, %s437, 5
        %p440 = scmp.lt.s32.totalorder %s33, 1
        %s441 = scalar_select %p440, %s33, 1
        %s442 = smul.addr %s439, 2
        %s443 = sadd.s32 %s441, %s442
        %s444 = scalar_lea.vmem %s2, %s443
        %p445 = pneg %p120
        %p446 = pneg %p117
        %s447 = sadd.s32 %s34, 1
        %p448 = scmp.lt.s32.totalorder %s447, 5
        %s449 = scalar_select %p448, %s447, 5
        %p450 = scmp.lt.s32.totalorder %s33, 1
        %s451 = scalar_select %p450, %s33, 1
        %s452 = smul.addr %s449, 2
        %s453 = sadd.s32 %s451, %s452
        %s454 = smul.addr %s453, 4
        %s455 = scalar_lea.vmem %s3, %s454
        %p456 = pneg %p150
        %p457 = pneg %p147
        %p458 = pneg %p171
        %p459 = pneg %p168
        %p460 = pneg %p192
        %p461 = pneg %p189
        %p462 = pneg %p213
        %p463 = pneg %p210
        %p464 = pneg %p234
        %p465 = pneg %p231
        %p466 = pneg %p255
        %p467 = pneg %p252
        %p468 = pneg %p283
        %p469 = pneg %p280
        %s470 = sand.u32 %s270, 1
        %s471 = scalar_lea.sflag [#allocation4], %s470
        %s472 = sand.u32 %s270, 1
        %s473 = smul.addr %s472, 4
        %s474 = scalar_lea.vmem [#allocation3], %s473
        %p475 = pneg %p311
        %p476 = pneg %p308
        %p477 = scmp.lt.s32.totalorder %s34, 4
        %s478 = scalar_select %p477, %s34, 4
        %p479 = scmp.lt.s32.totalorder %s33, 1
        %s480 = scalar_select %p479, %s33, 1
        %s481 = smul.addr %s478, 2
        %s482 = sadd.s32 %s480, %s481
        %s483 = smul.addr %s482, 4
        %s484 = scalar_lea.vmem %s10, %s483
        %p485 = pneg %p339
        %p486 = pneg %p336
        %s487 = sand.u32 %s326, 1
        %s488 = scalar_lea.sflag [#allocation6], %s487
        %s489 = sand.u32 %s326, 1
        %s490 = smul.addr %s489, 4
        %s491 = scalar_lea.vmem [#allocation5], %s490
        %p492 = scmp.lt.s32.totalorder %s33, 1
        %s493 = scalar_select %p492, %s33, 1
        %s494 = smul.addr %s493, 4
        %s495 = scalar_lea.vmem %s0, %s494
        %p496 = scmp.lt.s32.totalorder %s34, 5
        %s497 = scalar_select %p496, %s34, 5
        %p498 = scmp.lt.s32.totalorder %s33, 1
        %s499 = scalar_select %p498, %s33, 1
        %s500 = smul.addr %s497, 2
        %s501 = sadd.s32 %s499, %s500
        %s502 = scalar_lea.vmem %s1, %s501
        %s503 = sadd.s32 %s34, 1
        %p504 = scmp.lt.s32.totalorder %s503, 5
        %s505 = scalar_select %p504, %s503, 5
        %p506 = scmp.lt.s32.totalorder %s33, 1
        %s507 = scalar_select %p506, %s33, 1
        %s508 = smul.addr %s505, 2
        %s509 = sadd.s32 %s507, %s508
        %s510 = scalar_lea.vmem %s2, %s509
        %s511 = sadd.s32 %s34, 1
        %s512 = sadd.s32 %s34, 1
        %p513 = scmp.lt.s32.totalorder %s512, 5
        %s514 = scalar_select %p513, %s512, 5
        %p515 = scmp.lt.s32.totalorder %s33, 1
        %s516 = scalar_select %p515, %s33, 1
        %s517 = smul.addr %s514, 2
        %s518 = sadd.s32 %s516, %s517
        %s519 = smul.addr %s518, 4
        %s520 = scalar_lea.vmem %s3, %s519
        %s521 = sadd.s32 %s34, 1
        %p522 = scmp.lt.s32.totalorder %s34, 4
        %s523 = scalar_select %p522, %s34, 4
        %p524 = scmp.lt.s32.totalorder %s33, 1
        %s525 = scalar_select %p524, %s33, 1
        %s526 = smul.addr %s523, 2
        %s527 = sadd.s32 %s525, %s526
        %s528 = smul.addr %s527, 4
        %s529 = scalar_lea.vmem %s10, %s528
        %p530 = scmp.eq.s32.totalorder %s34, 0
        // Predicated region
        $region57: #{eagle_forward.1} parent=55 // pred_check
          %p531 = pneg %p530
        $region58: #{eagle_forward.1} parent=55 // pred_check_branch
          %533 = sbr.rel (%p531) target = $region60
        $region59: #{eagle_forward.1} parent=55 // pred_region
          %v534 = vld [vmem:[%s495] sm:$0xf]
          %535 = vst [vmem:[#allocation2] sm:$0xf] %v534
        $region60: #{eagle_forward.1} parent=55 // pred_fallthru
          _
        %v536 = vld [vmem:[#allocation2] sm:$0xf]
        %v537 = vld [vmem:[%s502] sm:$0x1]
        %v538 = vlaneseq
        %v539 = vshrl.u32 %v538, 7
        %v540 = vadd.s32 %v539, 8
        %v541 = vlaneseq
        %v542 = vshrl.u32 %v541, 7
        %v543 = vsub.s32 0, %v542
        %v544 = vrot.slane %v537, %v543
        %vm545 = vcmp.eq.s32.totalorder %v539, %v544
        %vm546 = vcmp.eq.s32.totalorder %v540, %v544
        %v547 = vsel %vm545, 1, 0
        %v548 = vsel %vm546, 1, 0
        %v549 = vcvt.s32.f32 %v547
        %v550 = vcvt.s32.f32 %v548
        %v551 = vld [vmem:[%s4] sm:$0xff]
        %v552 = vld [vmem:[%s4 + $0x8] sm:$0xff]
        %v553 = vld [vmem:[%s4 + $0x10] sm:$0xff]
        %v554 = vld [vmem:[%s4 + $0x18] sm:$0xff]
        %v555 = vld [vmem:[%s4 + $0x20] sm:$0xff]
        %v556 = vld [vmem:[%s4 + $0x28] sm:$0xff]
        %v557 = vld [vmem:[%s4 + $0x30] sm:$0xff]
        %v558 = vld [vmem:[%s4 + $0x38] sm:$0xff]
        %v559 = vld [vmem:[%s5] sm:$0xff]
        %v560 = vld [vmem:[%s5 + $0x8] sm:$0xff]
        %v561 = vld [vmem:[%s5 + $0x10] sm:$0xff]
        %v562 = vld [vmem:[%s5 + $0x18] sm:$0xff]
        %v563 = vld [vmem:[%s5 + $0x20] sm:$0xff]
        %v564 = vld [vmem:[%s5 + $0x28] sm:$0xff]
        %v565 = vld [vmem:[%s5 + $0x30] sm:$0xff]
        %v566 = vld [vmem:[%s5 + $0x38] sm:$0xff]
        %vm567 = vcmask 72704
        %v569 = vsel %vm567, %v559, 0
        %v572 = vsel %vm567, %v560, 0
        %v575 = vsel %vm567, %v561, 0
        %v578 = vsel %vm567, %v562, 0
        %v581 = vsel %vm567, %v563, 0
        %v584 = vsel %vm567, %v564, 0
        %v587 = vsel %vm567, %v565, 0
        %v590 = vsel %vm567, %v566, 0
        %vm592 = vcmask 1040384
        %v594 = vsel %vm592, %v550, 0
        %596 = vmatprep.subr.mxu0 0.0
        %597 = vmatpush1.msra.mxu0 0.0
        %598 = vmatprep.subr.mxu0 0.0
        %599 = vmatpush1.msra.mxu0 0.0
        %600 = vmatprep.subr.mxu0 0.0
        %601 = vmatpush1.msra.mxu0 0.0
        %602 = vmatprep.subr.mxu0 0.0
        %603 = vmatpush1.msra.mxu0 0.0
        %604 = vmatprep.subr.mxu0 0.0
        %605 = vmatpush1.msra.mxu0 0.0
        %606 = vmatprep.subr.mxu0 0.0
        %607 = vmatpush1.msra.mxu0 0.0
        %608 = vmatprep.subr.mxu0 0.0
        %609 = vmatpush1.msra.mxu0 0.0
        %610 = vmatprep.subr.mxu0 0.0
        %611 = vmatpush1.msra.mxu0 0.0
        %612 = vmatprep.subr.mxu0 0.0
        %613 = vmatpush1.msra.mxu0 0.0
        %614 = vmatprep.subr.mxu0 0.0
        %615 = vmatpush1.msra.mxu0 0.0
        %616 = vmatprep.subr.mxu0 0.0
        %617 = vmatpush1.msra.mxu0 0.0
        %618 = vmatprep.subr.mxu0 0.0
        %619 = vmatpush1.msra.mxu0 0.0
        %620 = vmatprep.subr.mxu0 0.0
        %621 = vmatpush1.msra.mxu0 0.0
        %622 = vmatprep.subr.mxu0 0.0
        %623 = vmatpush1.msra.mxu0 0.0
        %624 = vmatprep.subr.mxu0 0.0
        %625 = vmatpush1.msra.mxu0 %v594
        %626 = vmatprep.subr.mxu0 0.0
        %627 = vmatpush1.msra.mxu0 %v549
        %628 = vmatprep.subr.mxu0 0.0
        %629 = vmatpush2.msra.mxu0 0.0
        %630 = vmatprep.subr.mxu0 0.0
        %631 = vmatpush2.msra.mxu0 0.0
        %632 = vmatprep.subr.mxu0 0.0
        %633 = vmatpush2.msra.mxu0 0.0
        %634 = vmatprep.subr.mxu0 0.0
        %635 = vmatpush2.msra.mxu0 0.0
        %636 = vmatprep.subr.mxu0 0.0
        %637 = vmatpush2.msra.mxu0 0.0
        %638 = vmatprep.subr.mxu0 0.0
        %639 = vmatpush2.msra.mxu0 0.0
        %640 = vmatprep.subr.mxu0 0.0
        %641 = vmatpush2.msra.mxu0 0.0
        %642 = vmatprep.subr.mxu0 0.0
        %643 = vmatpush2.msra.mxu0 0.0
        %644 = vmatprep.subr.mxu0 0.0
        %645 = vmatpush2.msra.mxu0 0.0
        %646 = vmatprep.subr.mxu0 0.0
        %647 = vmatpush2.msra.mxu0 0.0
        %648 = vmatprep.subr.mxu0 0.0
        %649 = vmatpush2.msra.mxu0 0.0
        %650 = vmatprep.subr.mxu0 0.0
        %651 = vmatpush2.msra.mxu0 0.0
        %652 = vmatprep.subr.mxu0 0.0
        %653 = vmatpush2.msra.mxu0 0.0
        %654 = vmatprep.subr.mxu0 0.0
        %655 = vmatpush2.msra.mxu0 0.0
        %656 = vmatprep.subr.mxu0 0.0
        %657 = vmatpush2.msra.mxu0 0.0
        %658 = vmatprep.subr.mxu0 0.0
        %659 = vmatpush2.msra.mxu0 0.0
        %660 = vmatprep.mubr.f32.mxu0 0.0
        %661 = vmatmul.mubr.f32.gmra.mxu0 %v569
        %v662 = vpop.f32.mrf.mxu0
        %v663 = vadd.f32 0.0, %v662
        %v664 = vpop.f32.mrf.mxu0
        %665 = vmatprep.mubr.f32.mxu0 0.0
        %666 = vmatmul.mubr.f32.gmra.mxu0 %v572
        %v667 = vpop.f32.mrf.mxu0
        %v668 = vadd.f32 0.0, %v667
        %v669 = vpop.f32.mrf.mxu0
        %670 = vmatprep.mubr.f32.mxu0 0.0
        %671 = vmatmul.mubr.f32.gmra.mxu0 %v575
        %v672 = vpop.f32.mrf.mxu0
        %v673 = vadd.f32 0.0, %v672
        %v674 = vpop.f32.mrf.mxu0
        %675 = vmatprep.mubr.f32.mxu0 0.0
        %676 = vmatmul.mubr.f32.gmra.mxu0 %v578
        %v677 = vpop.f32.mrf.mxu0
        %v678 = vadd.f32 0.0, %v677
        %v679 = vpop.f32.mrf.mxu0
        %680 = vmatprep.mubr.f32.mxu0 0.0
        %681 = vmatmul.mubr.f32.gmra.mxu0 %v581
        %v682 = vpop.f32.mrf.mxu0
        %v683 = vadd.f32 0.0, %v682
        %v684 = vpop.f32.mrf.mxu0
        %685 = vmatprep.mubr.f32.mxu0 0.0
        %686 = vmatmul.mubr.f32.gmra.mxu0 %v584
        %v687 = vpop.f32.mrf.mxu0
        %v688 = vadd.f32 0.0, %v687
        %v689 = vpop.f32.mrf.mxu0
        %690 = vmatprep.mubr.f32.mxu0 0.0
        %691 = vmatmul.mubr.f32.gmra.mxu0 %v587
        %v692 = vpop.f32.mrf.mxu0
        %v693 = vadd.f32 0.0, %v692
        %v694 = vpop.f32.mrf.mxu0
        %695 = vmatprep.mubr.f32.mxu0 0.0
        %696 = vmatmul.mubr.f32.gmra.mxu0 %v590
        %v697 = vpop.f32.mrf.mxu0
        %v698 = vadd.f32 0.0, %v697
        %v699 = vpop.f32.mrf.mxu0
        %700 = vdwg.mxu0
        %vm701 = vcmask 31744
        %v703 = vsel %vm701, %v551, 0
        %v706 = vsel %vm701, %v552, 0
        %v709 = vsel %vm701, %v553, 0
        %v712 = vsel %vm701, %v554, 0
        %v715 = vsel %vm701, %v555, 0
        %v718 = vsel %vm701, %v556, 0
        %v721 = vsel %vm701, %v557, 0
        %v724 = vsel %vm701, %v558, 0
        %vm726 = vcmask 1043456
        %v728 = vsel %vm726, %v536, 0
        %730 = vmatprep.subr.mxu0 0.0
        %731 = vmatpush1.msra.mxu0 0.0
        %732 = vmatprep.subr.mxu0 0.0
        %733 = vmatpush1.msra.mxu0 0.0
        %734 = vmatprep.subr.mxu0 0.0
        %735 = vmatpush1.msra.mxu0 0.0
        %736 = vmatprep.subr.mxu0 0.0
        %737 = vmatpush1.msra.mxu0 0.0
        %738 = vmatprep.subr.mxu0 0.0
        %739 = vmatpush1.msra.mxu0 0.0
        %740 = vmatprep.subr.mxu0 0.0
        %741 = vmatpush1.msra.mxu0 0.0
        %742 = vmatprep.subr.mxu0 0.0
        %743 = vmatpush1.msra.mxu0 0.0
        %744 = vmatprep.subr.mxu0 0.0
        %745 = vmatpush1.msra.mxu0 0.0
        %746 = vmatprep.subr.mxu0 0.0
        %747 = vmatpush1.msra.mxu0 0.0
        %748 = vmatprep.subr.mxu0 0.0
        %749 = vmatpush1.msra.mxu0 0.0
        %750 = vmatprep.subr.mxu0 0.0
        %751 = vmatpush1.msra.mxu0 0.0
        %752 = vmatprep.subr.mxu0 0.0
        %753 = vmatpush1.msra.mxu0 0.0
        %754 = vmatprep.subr.mxu0 0.0
        %755 = vmatpush1.msra.mxu0 0.0
        %756 = vmatprep.subr.mxu0 0.0
        %757 = vmatpush1.msra.mxu0 0.0
        %758 = vmatprep.subr.mxu0 0.0
        %759 = vmatpush1.msra.mxu0 0.0
        %760 = vmatprep.subr.mxu0 0.0
        %761 = vmatpush1.msra.mxu0 %v728
        %762 = vmatprep.subr.mxu0 0.0
        %763 = vmatpush2.msra.mxu0 0.0
        %764 = vmatprep.subr.mxu0 0.0
        %765 = vmatpush2.msra.mxu0 0.0
        %766 = vmatprep.subr.mxu0 0.0
        %767 = vmatpush2.msra.mxu0 0.0
        %768 = vmatprep.subr.mxu0 0.0
        %769 = vmatpush2.msra.mxu0 0.0
        %770 = vmatprep.subr.mxu0 0.0
        %771 = vmatpush2.msra.mxu0 0.0
        %772 = vmatprep.subr.mxu0 0.0
        %773 = vmatpush2.msra.mxu0 0.0
        %774 = vmatprep.subr.mxu0 0.0
        %775 = vmatpush2.msra.mxu0 0.0
        %776 = vmatprep.subr.mxu0 0.0
        %777 = vmatpush2.msra.mxu0 0.0
        %778 = vmatprep.subr.mxu0 0.0
        %779 = vmatpush2.msra.mxu0 0.0
        %780 = vmatprep.subr.mxu0 0.0
        %781 = vmatpush2.msra.mxu0 0.0
        %782 = vmatprep.subr.mxu0 0.0
        %783 = vmatpush2.msra.mxu0 0.0
        %784 = vmatprep.subr.mxu0 0.0
        %785 = vmatpush2.msra.mxu0 0.0
        %786 = vmatprep.subr.mxu0 0.0
        %787 = vmatpush2.msra.mxu0 0.0
        %788 = vmatprep.subr.mxu0 0.0
        %789 = vmatpush2.msra.mxu0 0.0
        %790 = vmatprep.subr.mxu0 0.0
        %791 = vmatpush2.msra.mxu0 0.0
        %792 = vmatprep.subr.mxu0 0.0
        %793 = vmatpush2.msra.mxu0 0.0
        %794 = vmatprep.mubr.f32.mxu0 0.0
        %795 = vmatmul.mubr.f32.gmra.mxu0 %v703
        %v796 = vpop.f32.mrf.mxu0
        %v797 = vadd.f32 %v663, %v796
        %v798 = vpop.f32.mrf.mxu0
        %799 = vmatprep.mubr.f32.mxu0 0.0
        %800 = vmatmul.mubr.f32.gmra.mxu0 %v706
        %v801 = vpop.f32.mrf.mxu0
        %v802 = vadd.f32 %v668, %v801
        %v803 = vpop.f32.mrf.mxu0
        %804 = vmatprep.mubr.f32.mxu0 0.0
        %805 = vmatmul.mubr.f32.gmra.mxu0 %v709
        %v806 = vpop.f32.mrf.mxu0
        %v807 = vadd.f32 %v673, %v806
        %v808 = vpop.f32.mrf.mxu0
        %809 = vmatprep.mubr.f32.mxu0 0.0
        %810 = vmatmul.mubr.f32.gmra.mxu0 %v712
        %v811 = vpop.f32.mrf.mxu0
        %v812 = vadd.f32 %v678, %v811
        %v813 = vpop.f32.mrf.mxu0
        %814 = vmatprep.mubr.f32.mxu0 0.0
        %815 = vmatmul.mubr.f32.gmra.mxu0 %v715
        %v816 = vpop.f32.mrf.mxu0
        %v817 = vadd.f32 %v683, %v816
        %v818 = vpop.f32.mrf.mxu0
        %819 = vmatprep.mubr.f32.mxu0 0.0
        %820 = vmatmul.mubr.f32.gmra.mxu0 %v718
        %v821 = vpop.f32.mrf.mxu0
        %v822 = vadd.f32 %v688, %v821
        %v823 = vpop.f32.mrf.mxu0
        %824 = vmatprep.mubr.f32.mxu0 0.0
        %825 = vmatmul.mubr.f32.gmra.mxu0 %v721
        %v826 = vpop.f32.mrf.mxu0
        %v827 = vadd.f32 %v693, %v826
        %v828 = vpop.f32.mrf.mxu0
        %829 = vmatprep.mubr.f32.mxu0 0.0
        %830 = vmatmul.mubr.f32.gmra.mxu0 %v724
        %v831 = vpop.f32.mrf.mxu0
        %v832 = vadd.f32 %v698, %v831
        %v833 = vpop.f32.mrf.mxu0
        %834 = vdwg.mxu0
        %v835 = vld [vmem:[%s6] sm:$0xff]
        %v836 = vld [vmem:[%s6 + $0x8] sm:$0xff]
        %v837 = vld [vmem:[%s6 + $0x10] sm:$0xff]
        %v838 = vld [vmem:[%s6 + $0x18] sm:$0xff]
        %v839 = vld [vmem:[%s6 + $0x20] sm:$0xff]
        %v840 = vld [vmem:[%s6 + $0x28] sm:$0xff]
        %v841 = vld [vmem:[%s6 + $0x30] sm:$0xff]
        %v842 = vld [vmem:[%s6 + $0x38] sm:$0xff]
        %844 = vset.pattern.permute.xlu0 0
        %845 = vperm.xlu0 %844, %v835
        %v846 = vpop.permute.xlu0 %845
        %849 = vset.pattern.permute.xlu0 0
        %850 = vperm.xlu0 %849, %v836
        %v851 = vpop.permute.xlu0 %850
        %854 = vset.pattern.permute.xlu0 0
        %855 = vperm.xlu0 %854, %v837
        %v856 = vpop.permute.xlu0 %855
        %859 = vset.pattern.permute.xlu0 0
        %860 = vperm.xlu0 %859, %v838
        %v861 = vpop.permute.xlu0 %860
        %864 = vset.pattern.permute.xlu0 0
        %865 = vperm.xlu0 %864, %v839
        %v866 = vpop.permute.xlu0 %865
        %869 = vset.pattern.permute.xlu0 0
        %870 = vperm.xlu0 %869, %v840
        %v871 = vpop.permute.xlu0 %870
        %874 = vset.pattern.permute.xlu0 0
        %875 = vperm.xlu0 %874, %v841
        %v876 = vpop.permute.xlu0 %875
        %879 = vset.pattern.permute.xlu0 0
        %880 = vperm.xlu0 %879, %v842
        %v881 = vpop.permute.xlu0 %880
        %v883 = vadd.f32 %v797, %v846
        %v884 = vadd.f32 %v802, %v851
        %v885 = vadd.f32 %v807, %v856
        %v886 = vadd.f32 %v812, %v861
        %v887 = vadd.f32 %v817, %v866
        %v888 = vadd.f32 %v822, %v871
        %v889 = vadd.f32 %v827, %v876
        %v890 = vadd.f32 %v832, %v881
        %v891 = vmax.f32 %v883, 0.0
        %v892 = vmax.f32 %v884, 0.0
        %v893 = vmax.f32 %v885, 0.0
        %v894 = vmax.f32 %v886, 0.0
        %v895 = vmax.f32 %v887, 0.0
        %v896 = vmax.f32 %v888, 0.0
        %v897 = vmax.f32 %v889, 0.0
        %v898 = vmax.f32 %v890, 0.0
        %v899 = vld [vmem:[%s7] sm:$0xf]
        %v900 = vld [vmem:[%s8] sm:$0xf]
        %902 = vset.pattern.permute.xlu0 0
        %903 = vperm.xlu0 %902, %v900
        %v904 = vpop.permute.xlu0 %903
        %vm906 = vcmask 523264
        %v908 = vsel %vm906, %v899, 0
        %910 = vmatprep.subr.mxu0 0.0
        %911 = vmatpush1.msra.mxu0 0.0
        %912 = vmatprep.subr.mxu0 0.0
        %913 = vmatpush1.msra.mxu0 0.0
        %914 = vmatprep.subr.mxu0 0.0
        %915 = vmatpush1.msra.mxu0 0.0
        %916 = vmatprep.subr.mxu0 0.0
        %917 = vmatpush1.msra.mxu0 0.0
        %918 = vmatprep.subr.mxu0 0.0
        %919 = vmatpush1.msra.mxu0 0.0
        %920 = vmatprep.subr.mxu0 0.0
        %921 = vmatpush1.msra.mxu0 0.0
        %922 = vmatprep.subr.mxu0 0.0
        %923 = vmatpush1.msra.mxu0 0.0
        %924 = vmatprep.subr.mxu0 0.0
        %925 = vmatpush1.msra.mxu0 0.0
        %926 = vmatprep.subr.mxu0 0.0
        %927 = vmatpush1.msra.mxu0 %v898
        %928 = vmatprep.subr.mxu0 0.0
        %929 = vmatpush1.msra.mxu0 %v897
        %930 = vmatprep.subr.mxu0 0.0
        %931 = vmatpush1.msra.mxu0 %v896
        %932 = vmatprep.subr.mxu0 0.0
        %933 = vmatpush1.msra.mxu0 %v895
        %934 = vmatprep.subr.mxu0 0.0
        %935 = vmatpush1.msra.mxu0 %v894
        %936 = vmatprep.subr.mxu0 0.0
        %937 = vmatpush1.msra.mxu0 %v893
        %938 = vmatprep.subr.mxu0 0.0
        %939 = vmatpush1.msra.mxu0 %v892
        %940 = vmatprep.subr.mxu0 0.0
        %941 = vmatpush1.msra.mxu0 %v891
        %942 = vmatprep.subr.mxu0 0.0
        %943 = vmatpush2.msra.mxu0 0.0
        %944 = vmatprep.subr.mxu0 0.0
        %945 = vmatpush2.msra.mxu0 0.0
        %946 = vmatprep.subr.mxu0 0.0
        %947 = vmatpush2.msra.mxu0 0.0
        %948 = vmatprep.subr.mxu0 0.0
        %949 = vmatpush2.msra.mxu0 0.0
        %950 = vmatprep.subr.mxu0 0.0
        %951 = vmatpush2.msra.mxu0 0.0
        %952 = vmatprep.subr.mxu0 0.0
        %953 = vmatpush2.msra.mxu0 0.0
        %954 = vmatprep.subr.mxu0 0.0
        %955 = vmatpush2.msra.mxu0 0.0
        %956 = vmatprep.subr.mxu0 0.0
        %957 = vmatpush2.msra.mxu0 0.0
        %958 = vmatprep.subr.mxu0 0.0
        %959 = vmatpush2.msra.mxu0 0.0
        %960 = vmatprep.subr.mxu0 0.0
        %961 = vmatpush2.msra.mxu0 0.0
        %962 = vmatprep.subr.mxu0 0.0
        %963 = vmatpush2.msra.mxu0 0.0
        %964 = vmatprep.subr.mxu0 0.0
        %965 = vmatpush2.msra.mxu0 0.0
        %966 = vmatprep.subr.mxu0 0.0
        %967 = vmatpush2.msra.mxu0 0.0
        %968 = vmatprep.subr.mxu0 0.0
        %969 = vmatpush2.msra.mxu0 0.0
        %970 = vmatprep.subr.mxu0 0.0
        %971 = vmatpush2.msra.mxu0 0.0
        %972 = vmatprep.subr.mxu0 0.0
        %973 = vmatpush2.msra.mxu0 0.0
        %974 = vmatprep.mubr.f32.mxu0 0.0
        %975 = vmatmul.mubr.f32.gmra.mxu0 %v908
        %v976 = vpop.f32.mrf.mxu0
        %v977 = vadd.f32 %v904, %v976
        %v978 = vpop.f32.mrf.mxu0
        %979 = vdwg.mxu0
        %v980 = vld [vmem:[%s520] sm:$0xf]
        %v981 = vadd.f32 %v536, %v977
        %v982 = vsub.f32 %v980, %v536
        %v983 = vld [vmem:[%s510] sm:$0x1]
        %vm984 = vcmp.eq.s32.totalorder %v983, 4
        %vm985 = vcmp.eq.s32.totalorder %v983, 6
        %vm986 = vmor %vm984, %vm985
        %vm987 = vcmp.eq.s32.totalorder %v983, 2
        %vm988 = vmor %vm986, %vm987
        %v989 = vsel %vm988, 1, 0
        %v990 = vlaneseq
        %v991 = vshrl.u32 %v990, 7
        %v992 = vsub.s32 0, %v991
        %v993 = vrot.slane %v989, %v992
        %vm994 = vcmp.eq.s32.totalorder %v993, 1
        %v995 = vsel %vm994, %v980, %v981
        %996 = vst [vmem:[%s474] sm:$0xf] %v977
        %997 = vst [vmem:[%s529] sm:$0xf] %v995
        %998 = vst [vmem:[%s491] sm:$0xf] %v982
        %999 = vst [vmem:[#allocation2] sm:$0xf] %v995
        %s1000 = sand.u32 %s270, 1
        %s1001 = scalar_lea.sflag [#allocation4], %s1000
        %s1002 = sand.u32 %s270, 1
        %s1003 = smul.addr %s1002, 4
        %s1004 = scalar_lea.vmem [#allocation3], %s1003
        %p1005 = scmp.lt.s32.totalorder %s34, 4
        %s1006 = scalar_select %p1005, %s34, 4
        %p1007 = scmp.lt.s32.totalorder %s33, 1
        %s1008 = scalar_select %p1007, %s33, 1
        %s1009 = smul.addr %s1006, 2
        %s1010 = sadd.s32 %s1008, %s1009
        %s1011 = smul.addr %s1010, 4
        %s1012 = scalar_lea.vmem %s10, %s1011
        %s1013 = sand.u32 %s326, 1
        %s1014 = scalar_lea.sflag [#allocation6], %s1013
        %s1015 = sand.u32 %s326, 1
        %s1016 = smul.addr %s1015, 4
        %s1017 = scalar_lea.vmem [#allocation5], %s1016
        // Predicated region
        $region61: #{eagle_forward.1} parent=55 // pred_check
          %p1018 = pneg %p280
        $region62: #{eagle_forward.1} parent=55 // pred_check_branch
          %1020 = sbr.rel (%p1018) target = $region64
        $region63: #{eagle_forward.1} parent=55 // pred_region
          %s1022 = ssub.s32 64, 64
          %1023 = vsyncadd %s1001, %s1022
          %s1024 = smul.addr %s34, 2
          %s1025 = sadd.s32 %s33, %s1024
          %s1026 = smul.addr %s1025, 64
          %s1027 = scalar_lea.hbm %s9, %s1026
          %s1029 = sshll.u32 %s1004, 4
          %s1030 = int_to_ptr.vmem [resolvable:$true] %s1029
          %1032 = dma.vmem_to_hbm [thread:$0]  %s1030, 64, %s1027, %s1001
        $region64: #{eagle_forward.1} parent=55 // pred_fallthru
          _
        // Predicated region
        $region65: #{eagle_forward.1} parent=55 // pred_check
          %p1033 = pneg %p308
        $region66: #{eagle_forward.1} parent=55 // pred_check_branch
          %1035 = sbr.rel (%p1033) target = $region68
        $region67: #{eagle_forward.1} parent=55 // pred_region
          _
        $region68: #{eagle_forward.1} parent=55 // pred_fallthru
          _
        // Predicated region
        $region69: #{eagle_forward.1} parent=55 // pred_check
          %p1036 = pneg %p336
        $region70: #{eagle_forward.1} parent=55 // pred_check_branch
          %1038 = sbr.rel (%p1036) target = $region72
        $region71: #{eagle_forward.1} parent=55 // pred_region
          %s1040 = ssub.s32 64, 64
          %1041 = vsyncadd %s1014, %s1040
          %s1042 = smul.addr %s34, 2
          %s1043 = sadd.s32 %s33, %s1042
          %s1044 = smul.addr %s1043, 64
          %s1045 = scalar_lea.hbm %s11, %s1044
          %s1047 = sshll.u32 %s1017, 4
          %s1048 = int_to_ptr.vmem [resolvable:$true] %s1047
          %1050 = dma.vmem_to_hbm [thread:$0]  %s1048, 64, %s1045, %s1014
        $region72: #{eagle_forward.1} parent=55 // pred_fallthru
          _
      $region56: #{eagle_forward.1} parent=5 // pred_fallthru
        _
      %p1051 = scmp.le.s32.totalorder 2, %s24
      // Predicated region
      $region73: #{eagle_forward.1} parent=5 // pred_check
        %p1052 = pneg %p1051
      $region74: #{eagle_forward.1} parent=5 // pred_check_branch
        %1054 = sbr.rel (%p1052) target = $region76
      $region75: #{eagle_forward.1} parent=5 // pred_region
        %s1055 = ssub.s32 %s24, 2
        // Predicated region
        $region77: #{eagle_forward.1} parent=75 // pred_check
          %p1056 = pneg %p286
        $region78: #{eagle_forward.1} parent=75 // pred_check_branch
          %1058 = sbr.rel (%p1056) target = $region80
        $region79: #{eagle_forward.1} parent=75 // pred_region
          %s1059 = sand.u32 %s271, 1
          %s1060 = scalar_lea.sflag [#allocation4], %s1059
          %s1061 = sand.u32 %s271, 1
          %s1062 = smul.addr %s1061, 4
          %s1063 = scalar_lea.vmem [#allocation3], %s1062
          %1064 = dma.done %s1060, 64
        $region80: #{eagle_forward.1} parent=75 // pred_fallthru
          _
        // Predicated region
        $region81: #{eagle_forward.1} parent=75 // pred_check
          %p1065 = pneg %p314
        $region82: #{eagle_forward.1} parent=75 // pred_check_branch
          %1067 = sbr.rel (%p1065) target = $region84
        $region83: #{eagle_forward.1} parent=75 // pred_region
          %p1068 = scmp.lt.s32.totalorder %s36, 4
          %s1069 = scalar_select %p1068, %s36, 4
          %p1070 = scmp.lt.s32.totalorder %s35, 1
          %s1071 = scalar_select %p1070, %s35, 1
          %s1072 = smul.addr %s1069, 2
          %s1073 = sadd.s32 %s1071, %s1072
          %s1074 = smul.addr %s1073, 4
          %s1075 = scalar_lea.vmem %s10, %s1074
        $region84: #{eagle_forward.1} parent=75 // pred_fallthru
          _
        // Predicated region
        $region85: #{eagle_forward.1} parent=75 // pred_check
          %p1076 = pneg %p342
        $region86: #{eagle_forward.1} parent=75 // pred_check_branch
          %1078 = sbr.rel (%p1076) target = $region88
        $region87: #{eagle_forward.1} parent=75 // pred_region
          %s1079 = sand.u32 %s327, 1
          %s1080 = scalar_lea.sflag [#allocation6], %s1079
          %s1081 = sand.u32 %s327, 1
          %s1082 = smul.addr %s1081, 4
          %s1083 = scalar_lea.vmem [#allocation5], %s1082
          %1084 = dma.done %s1080, 64
        $region88: #{eagle_forward.1} parent=75 // pred_fallthru
          _
      $region76: #{eagle_forward.1} parent=5 // pred_fallthru
        _
    $region6: #{eagle_forward.1} parent=1 // loop_footer
      %s28 = sadd.s32 1, %s24
    $region7: #{eagle_forward.1} parent=1 // loop_footer_branch
      %23 = sbr.rel target = $region3
    $region8: #{eagle_forward.1} parent=1 // loop_exit
      _
    %1085 = vsyncpa [#allocation4], 1
    %s1086 = scalar_lea.sflag [#allocation4], 1
    %1087 = vsyncpa %s1086, 1
    %1088 = vsyncpa [#allocation6], 1
    %s1089 = scalar_lea.sflag [#allocation6], 1
    %1090 = vsyncpa %s1089, 1

</llo_original>
